<compile_context>
chip_gen: v7x
topology: tpu7x:2x2x1
jax: 0.10.0
libtpu: 0.0.40
codegen_flags: <defaults>
</compile_context>

<pallas_src>
import functools

import jax
import jax.numpy as jnp
from jax import lax
from jax.experimental import pallas as pl
from jax.experimental.pallas import tpu as pltpu


def _downsampler_kernel(B, L, Lp, Cin, Cout,
                        x_ref, w1_ref, b1_ref, w2_ref, b2_ref,
                        o_ref, xpad_ref, ypad_ref):
    # x_ref   : (B, Cin, L)       NCL input block
    # w1_ref  : (3, Cin, Cout)    per-tap conv1 weight, bf16
    # b1_ref  : (1, Cout)         f32
    # w2_ref  : (3, Cout, Cout)   per-tap conv2 weight, bf16
    # b2_ref  : (1, Cout)         f32
    # o_ref   : (B, Cout, Lp)     NCL output block
    # xpad_ref: (B, L+2, Cin)     VMEM scratch: NLC layout + conv1 halo (f32)
    # ypad_ref: (B, L+2, Cout)    VMEM scratch: conv2 halo, reused by the pool
    f32 = jnp.float32
    bf16 = jnp.bfloat16

    # ---- NCL -> NLC: zero the two halo rows, ONE batched transpose store ----
    xpad_ref[:, pl.ds(0, 1), :] = jnp.zeros((B, 1, Cin), f32)
    xpad_ref[:, pl.ds(L + 1, 1), :] = jnp.zeros((B, 1, Cin), f32)
    xpad_ref[:, pl.ds(1, L), :] = jnp.transpose(x_ref[...], (0, 2, 1))

    # ---- conv1 (k=3, s=1, p=1): 3 per-tap matmuls, f32 accumulate ----------
    # Taps are ref slices (free VMEM views); operands cast to bf16 for the
    # MXU-native path; no (B*L, 3*Cin) im2col concat buffer.
    acc = None
    for k in range(3):
        a = xpad_ref[:, pl.ds(k, L), :].reshape(B * L, Cin).astype(bf16)
        t = jnp.dot(a, w1_ref[k], preferred_element_type=f32)
        acc = t if acc is None else acc + t
    y = jnp.maximum(acc + b1_ref[...], 0.0)                   # (B*L, Cout) f32

    # ---- conv2 halo padding (boundary rows only) + interior ----------------
    ypad_ref[:, pl.ds(0, 1), :] = jnp.zeros((B, 1, Cout), f32)
    ypad_ref[:, pl.ds(L + 1, 1), :] = jnp.zeros((B, 1, Cout), f32)
    ypad_ref[:, pl.ds(1, L), :] = y.reshape(B, L, Cout)

    # ---- conv2 (k=3, s=1, p=1): 3 per-tap matmuls, f32 accumulate ----------
    acc = None
    for k in range(3):
        a = ypad_ref[:, pl.ds(k, L), :].reshape(B * L, Cout).astype(bf16)
        t = jnp.dot(a, w2_ref[k], preferred_element_type=f32)
        acc = t if acc is None else acc + t
    z = jnp.maximum(acc + b2_ref[...], 0.0)                   # (B*L, Cout) f32

    # ---- MaxPool1d(k=3, s=2, p=1) -------------------------------------------
    # Reuse ypad_ref: overwrite the interior with z; the halo rows are still
    # zero, which equals PyTorch's -inf pool padding ONLY because z is
    # post-ReLU (z >= 0).  Revisit if the activation ever changes.
    ypad_ref[:, pl.ds(1, L), :] = z.reshape(B, L, Cout)
    a0 = ypad_ref[:, pl.ds(0, Lp, stride=2), :]               # tap 2t   (padded coords)
    a1 = ypad_ref[:, pl.ds(1, Lp, stride=2), :]               # tap 2t+1
    a2 = ypad_ref[:, pl.ds(2, Lp, stride=2), :]               # tap 2t+2
    pooled = jnp.maximum(jnp.maximum(a0, a1), a2)             # (B, Lp, Cout)

    # ---- NLC -> NCL: ONE batched transpose, single dense output store ------
    o_ref[...] = jnp.transpose(pooled, (0, 2, 1))             # (B, Cout, Lp)


def _vmem_budget_bytes():
    """Generation-aware VMEM cap: ~75% of physical VMEM per core
    (v7x: 64 MiB -> ~48 MiB, v5e/v6e: 128 MiB -> ~96 MiB)."""
    try:
        return int(pltpu.get_tpu_info().vmem_capacity_bytes * 0.75)
    except Exception:                                          # pragma: no cover
        return 48 << 20                                        # v7x-safe fallback


def _footprint_bytes(b, L, Lp, Cin, Cout):
    """Per-grid-step VMEM footprint, *including* the in-kernel temporaries
    (the previous estimate omitted them, which is exactly when it mattered)."""
    io = 2 * 4 * (b * Cin * L + b * Cout * Lp)                 # double-buffered x / out blocks
    wts = 2 * (2 * (3 * Cin * Cout + 3 * Cout * Cout)          # bf16 weights (x2 buffers, conservative)
               + 4 * 2 * Cout)                                 # f32 biases
    scratch = 4 * b * (L + 2) * (Cin + Cout)                   # xpad + ypad (f32)
    tmps = (2 * b * L * max(Cin, Cout)                         # one bf16 tap copy
            + 4 * b * L * Cout * 3                             # acc + y + z (f32)
            + 4 * b * Lp * Cout * 2)                           # pooled + transposed copy
    return io + wts + scratch + tmps


def _pick_block_batch(n, L, Lp, Cin, Cout, budget):
    """Largest batch tile that fits the VMEM budget.  ~512-2048 matmul rows
    per step amortize the ~0.35us/step pipeline overhead; past ~2048 rows we
    stop growing B so multiple grid steps remain (helps v7x megacore, free
    elsewhere)."""
    best = 1
    for b in range(1, n + 1):
        if n % b:
            continue
        if b > 1 and b * L > 2048:
            continue
        if _footprint_bytes(b, L, Lp, Cin, Cout) > budget:
            continue
        best = b
    return best


def downsampler(x_ncl, w1, b1, w2, b2, block_batch=None):
    """x_ncl: (N, Cin, L) float32; w*/b*: PyTorch Conv1d(in, out, 3, 1, 1) params."""
    N, Cin, L = x_ncl.shape
    Cout = w1.shape[0]
    assert L % 2 == 0, "kernel assumes even sequence length"
    Lp = L // 2                                 # MaxPool1d(3,2,1) output length for even L

    budget = _vmem_budget_bytes()
    B = block_batch if block_batch is not None else _pick_block_batch(
        N, L, Lp, Cin, Cout, budget)
    assert N % B == 0
    # TODO(synk): add an L-tiling grid axis with a 2-row halo for sequences
    # whose whole-L, B=1 footprint exceeds the per-core VMEM budget (matters
    # first on v7x's 64 MiB).
    assert _footprint_bytes(B, L, Lp, Cin, Cout) <= budget, \
        "sequence too long for whole-L blocking; needs L-tiling"

    # Per-tap weights (3, Cin, Cout), pre-cast to bf16 (MXU-native path).
    # Tiny one-time parameter transforms, not activation passes.
    w1k = jnp.transpose(w1, (2, 1, 0)).astype(jnp.bfloat16)    # (3, Cin, Cout)
    w2k = jnp.transpose(w2, (2, 1, 0)).astype(jnp.bfloat16)    # (3, Cout, Cout)
    b1k = b1.reshape(1, Cout).astype(jnp.float32)
    b2k = b2.reshape(1, Cout).astype(jnp.float32)

    fp = _footprint_bytes(B, L, Lp, Cin, Cout)
    cp = {"dimension_semantics": ("parallel",)}
    if fp > (8 << 20):
        # Raise the scoped-VMEM limit only when needed, capped by the
        # generation-aware budget (never near v7x's 64 MiB physical VMEM).
        cp["vmem_limit_bytes"] = int(min(max(2 * fp, 32 << 20), budget))

    kernel = functools.partial(_downsampler_kernel, B, L, Lp, Cin, Cout)
    return pl.pallas_call(
        kernel,
        out_shape=jax.ShapeDtypeStruct((N, Cout, Lp), jnp.float32),
        grid_spec=pltpu.PrefetchScalarGridSpec(
            num_scalar_prefetch=0,
            grid=(N // B,),
            in_specs=[
                pl.BlockSpec((B, Cin, L), lambda n: (n, 0, 0)),
                # Grid-invariant weights/biases: constant index_map => fetched
                # once, never re-DMA'd across grid steps.
                pl.BlockSpec((3, Cin, Cout), lambda n: (0, 0, 0)),
                pl.BlockSpec((1, Cout), lambda n: (0, 0)),
                pl.BlockSpec((3, Cout, Cout), lambda n: (0, 0, 0)),
                pl.BlockSpec((1, Cout), lambda n: (0, 0)),
            ],
            out_specs=pl.BlockSpec((B, Cout, Lp), lambda n: (n, 0, 0)),
            scratch_shapes=[
                pltpu.VMEM((B, L + 2, Cin), jnp.float32),
                pltpu.VMEM((B, L + 2, Cout), jnp.float32),
            ],
        ),
        compiler_params=pltpu.CompilerParams(**cp),
    )(x_ncl, w1k, b1k, w2k, b2k)


def downsampler_ref(x_ncl, w1, b1, w2, b2):
    """Independent pure-JAX reference (matches PyTorch semantics, f32)."""
    dn = ('NCH', 'OIH', 'NCH')
    y = lax.conv_general_dilated(x_ncl, w1, (1,), ((1, 1),),
                                 dimension_numbers=dn) + b1[None, :, None]
    y = jnp.maximum(y, 0.0)
    z = lax.conv_general_dilated(y, w2, (1,), ((1, 1),),
                                 dimension_numbers=dn) + b2[None, :, None]
    z = jnp.maximum(z, 0.0)
    p = lax.reduce_window(z, -jnp.inf, lax.max,
                          window_dimensions=(1, 1, 3),
                          window_strides=(1, 1, 2),
                          padding=((0, 0), (0, 0), (1, 1)))
    return p


if __name__ == "__main__":
    N, Cin, Cout, L = 2, 4, 8, 16
    key = jax.random.PRNGKey(0)
    k1, k2, k3, k4, k5 = jax.random.split(key, 5)
    # Deterministic synthetic parameters (shapes match nn.Conv1d(in, out, 3, 1, 1)).
    x = jax.random.normal(k1, (N, Cin, L), jnp.float32)
    w1 = jax.random.normal(k2, (Cout, Cin, 3), jnp.float32) * 0.2
    b1 = jax.random.normal(k3, (Cout,), jnp.float32) * 0.1
    w2 = jax.random.normal(k4, (Cout, Cout, 3), jnp.float32) * 0.2
    b2 = jax.random.normal(k5, (Cout,), jnp.float32) * 0.1

    out = jax.block_until_ready(downsampler(x, w1, b1, w2, b2))
    ref = jax.block_until_ready(downsampler_ref(x, w1, b1, w2, b2))

    assert out.shape == (N, Cout, L // 2), out.shape
    max_err = float(jnp.max(jnp.abs(out - ref)))
    # bf16 MXU operands vs f32 reference => loosened tolerance.
    assert jnp.allclose(out, ref, atol=5e-2, rtol=5e-2), max_err
    print("KERNEL_OK")
</pallas_src>

<mosaic_0001>
module attributes {stable_mosaic.version = 11 : i64} {
  func.func @_downsampler_kernel(%arg0: i32, %arg1: memref<2x4x16xf32, #tpu.memory_space<vmem>>, %arg2: memref<3x4x8xbf16, #tpu.memory_space<vmem>>, %arg3: memref<1x8xf32, #tpu.memory_space<vmem>>, %arg4: memref<3x8x8xbf16, #tpu.memory_space<vmem>>, %arg5: memref<1x8xf32, #tpu.memory_space<vmem>>, %arg6: memref<2x8x8xf32, #tpu.memory_space<vmem>>, %arg7: memref<2x18x4xf32, #tpu.memory_space<vmem>>, %arg8: memref<2x18x8xf32, #tpu.memory_space<vmem>>) attributes {dimension_semantics = [#tpu.dimension_semantics<parallel>], iteration_bounds = array<i64: 1>, scalar_prefetch = 0 : i64, scratch_operands = 2 : i64, tpu.core_type = #tpu.core_type<tc>, window_params = [{transform_indices = @transform_0, window_bounds = array<i64: 2, 4, 16>}, {pipeline_mode = #tpu.pipeline_mode<synchronous>, transform_indices = @transform_1, window_bounds = array<i64: 3, 4, 8>}, {pipeline_mode = #tpu.pipeline_mode<synchronous>, transform_indices = @transform_2, window_bounds = array<i64: 1, 8>}, {pipeline_mode = #tpu.pipeline_mode<synchronous>, transform_indices = @transform_3, window_bounds = array<i64: 3, 8, 8>}, {pipeline_mode = #tpu.pipeline_mode<synchronous>, transform_indices = @transform_4, window_bounds = array<i64: 1, 8>}, {transform_indices = @transform_5, window_bounds = array<i64: 2, 8, 8>}]} {
    %cst = arith.constant 0.000000e+00 : f32
    %0 = vector.broadcast %cst : f32 to vector<2x1x4xf32>
    %c0 = arith.constant 0 : index
    %c0_0 = arith.constant 0 : index
    %c0_1 = arith.constant 0 : index
    %1 = vector.load %arg7[%c0, %c0_0, %c0_1] : memref<2x18x4xf32, #tpu.memory_space<vmem>>, vector<2x1x4xf32>
    tpu.vector_store %arg7[%c0, %c0_0, %c0_1], %0 {strides = array<i32>} : memref<2x18x4xf32, #tpu.memory_space<vmem>>, vector<2x1x4xf32>,
    %cst_2 = arith.constant 0.000000e+00 : f32
    %2 = vector.broadcast %cst_2 : f32 to vector<2x1x4xf32>
    %c0_3 = arith.constant 0 : index
    %c17 = arith.constant 17 : index
    %c0_4 = arith.constant 0 : index
    %3 = vector.load %arg7[%c0_3, %c17, %c0_4] : memref<2x18x4xf32, #tpu.memory_space<vmem>>, vector<2x1x4xf32>
    tpu.vector_store %arg7[%c0_3, %c17, %c0_4], %2 {strides = array<i32>} : memref<2x18x4xf32, #tpu.memory_space<vmem>>, vector<2x1x4xf32>,
    %c0_5 = arith.constant 0 : index
    %c0_6 = arith.constant 0 : index
    %c0_7 = arith.constant 0 : index
    %4 = vector.load %arg1[%c0_5, %c0_6, %c0_7] : memref<2x4x16xf32, #tpu.memory_space<vmem>>, vector<2x4x16xf32>
    %5 = tpu.transpose %4, [0, 2, 1] : vector<2x4x16xf32> -> vector<2x16x4xf32>
    %c0_8 = arith.constant 0 : index
    %c1 = arith.constant 1 : index
    %c0_9 = arith.constant 0 : index
    %6 = vector.load %arg7[%c0_8, %c1, %c0_9] : memref<2x18x4xf32, #tpu.memory_space<vmem>>, vector<2x16x4xf32>
    tpu.vector_store %arg7[%c0_8, %c1, %c0_9], %5 {strides = array<i32>} : memref<2x18x4xf32, #tpu.memory_space<vmem>>, vector<2x16x4xf32>,
    %c0_10 = arith.constant 0 : index
    %c0_11 = arith.constant 0 : index
    %c0_12 = arith.constant 0 : index
    %7 = vector.load %arg7[%c0_10, %c0_11, %c0_12] : memref<2x18x4xf32, #tpu.memory_space<vmem>>, vector<2x16x4xf32>
    %8 = vector.shape_cast %7 : vector<2x16x4xf32> to vector<32x4xf32>
    %9 = arith.truncf %8 : vector<32x4xf32> to vector<32x4xbf16>
    %c0_13 = arith.constant 0 : index
    %c0_14 = arith.constant 0 : index
    %c0_15 = arith.constant 0 : index
    %10 = vector.load %arg2[%c0_13, %c0_14, %c0_15] : memref<3x4x8xbf16, #tpu.memory_space<vmem>>, vector<1x4x8xbf16>
    %11 = vector.shape_cast %10 : vector<1x4x8xbf16> to vector<4x8xbf16>
    %cst_16 = arith.constant dense<0.000000e+00> : vector<32x8xf32>
    %12 = tpu.matmul %9, %11, %cst_16 {dimension_numbers = #tpu.dot_dimension_numbers<[1], [0], [0], [1], [0, 0, 1, 1], [], []>} : vector<32x4xbf16>, vector<4x8xbf16>, vector<32x8xf32> -> vector<32x8xf32>
    %c0_17 = arith.constant 0 : index
    %c1_18 = arith.constant 1 : index
    %c0_19 = arith.constant 0 : index
    %13 = vector.load %arg7[%c0_17, %c1_18, %c0_19] : memref<2x18x4xf32, #tpu.memory_space<vmem>>, vector<2x16x4xf32>
    %14 = vector.shape_cast %13 : vector<2x16x4xf32> to vector<32x4xf32>
    %15 = arith.truncf %14 : vector<32x4xf32> to vector<32x4xbf16>
    %c1_20 = arith.constant 1 : index
    %c0_21 = arith.constant 0 : index
    %c0_22 = arith.constant 0 : index
    %16 = vector.load %arg2[%c1_20, %c0_21, %c0_22] : memref<3x4x8xbf16, #tpu.memory_space<vmem>>, vector<1x4x8xbf16>
    %17 = vector.shape_cast %16 : vector<1x4x8xbf16> to vector<4x8xbf16>
    %cst_23 = arith.constant dense<0.000000e+00> : vector<32x8xf32>
    %18 = tpu.matmul %15, %17, %cst_23 {dimension_numbers = #tpu.dot_dimension_numbers<[1], [0], [0], [1], [0, 0, 1, 1], [], []>} : vector<32x4xbf16>, vector<4x8xbf16>, vector<32x8xf32> -> vector<32x8xf32>
    %19 = arith.addf %12, %18 : vector<32x8xf32>
    %c0_24 = arith.constant 0 : index
    %c2 = arith.constant 2 : index
    %c0_25 = arith.constant 0 : index
    %20 = vector.load %arg7[%c0_24, %c2, %c0_25] : memref<2x18x4xf32, #tpu.memory_space<vmem>>, vector<2x16x4xf32>
    %21 = vector.shape_cast %20 : vector<2x16x4xf32> to vector<32x4xf32>
    %22 = arith.truncf %21 : vector<32x4xf32> to vector<32x4xbf16>
    %c2_26 = arith.constant 2 : index
    %c0_27 = arith.constant 0 : index
    %c0_28 = arith.constant 0 : index
    %23 = vector.load %arg2[%c2_26, %c0_27, %c0_28] : memref<3x4x8xbf16, #tpu.memory_space<vmem>>, vector<1x4x8xbf16>
    %24 = vector.shape_cast %23 : vector<1x4x8xbf16> to vector<4x8xbf16>
    %cst_29 = arith.constant dense<0.000000e+00> : vector<32x8xf32>
    %25 = tpu.matmul %22, %24, %cst_29 {dimension_numbers = #tpu.dot_dimension_numbers<[1], [0], [0], [1], [0, 0, 1, 1], [], []>} : vector<32x4xbf16>, vector<4x8xbf16>, vector<32x8xf32> -> vector<32x8xf32>
    %26 = arith.addf %19, %25 : vector<32x8xf32>
    %c0_30 = arith.constant 0 : index
    %c0_31 = arith.constant 0 : index
    %27 = vector.load %arg3[%c0_30, %c0_31] : memref<1x8xf32, #tpu.memory_space<vmem>>, vector<1x8xf32>
    %28 = vector.broadcast %27 : vector<1x8xf32> to vector<32x8xf32>
    %29 = arith.addf %26, %28 : vector<32x8xf32>
    %cst_32 = arith.constant 0.000000e+00 : f32
    %30 = vector.broadcast %cst_32 : f32 to vector<32x8xf32>
    %31 = arith.maximumf %29, %30 : vector<32x8xf32>
    %cst_33 = arith.constant 0.000000e+00 : f32
    %32 = vector.broadcast %cst_33 : f32 to vector<2x1x8xf32>
    %c0_34 = arith.constant 0 : index
    %c0_35 = arith.constant 0 : index
    %c0_36 = arith.constant 0 : index
    %33 = vector.load %arg8[%c0_34, %c0_35, %c0_36] : memref<2x18x8xf32, #tpu.memory_space<vmem>>, vector<2x1x8xf32>
    tpu.vector_store %arg8[%c0_34, %c0_35, %c0_36], %32 {strides = array<i32>} : memref<2x18x8xf32, #tpu.memory_space<vmem>>, vector<2x1x8xf32>,
    %cst_37 = arith.constant 0.000000e+00 : f32
    %34 = vector.broadcast %cst_37 : f32 to vector<2x1x8xf32>
    %c0_38 = arith.constant 0 : index
    %c17_39 = arith.constant 17 : index
    %c0_40 = arith.constant 0 : index
    %35 = vector.load %arg8[%c0_38, %c17_39, %c0_40] : memref<2x18x8xf32, #tpu.memory_space<vmem>>, vector<2x1x8xf32>
    tpu.vector_store %arg8[%c0_38, %c17_39, %c0_40], %34 {strides = array<i32>} : memref<2x18x8xf32, #tpu.memory_space<vmem>>, vector<2x1x8xf32>,
    %36 = vector.shape_cast %31 : vector<32x8xf32> to vector<2x16x8xf32>
    %c0_41 = arith.constant 0 : index
    %c1_42 = arith.constant 1 : index
    %c0_43 = arith.constant 0 : index
    %37 = vector.load %arg8[%c0_41, %c1_42, %c0_43] : memref<2x18x8xf32, #tpu.memory_space<vmem>>, vector<2x16x8xf32>
    tpu.vector_store %arg8[%c0_41, %c1_42, %c0_43], %36 {strides = array<i32>} : memref<2x18x8xf32, #tpu.memory_space<vmem>>, vector<2x16x8xf32>,
    %c0_44 = arith.constant 0 : index
    %c0_45 = arith.constant 0 : index
    %c0_46 = arith.constant 0 : index
    %38 = vector.load %arg8[%c0_44, %c0_45, %c0_46] : memref<2x18x8xf32, #tpu.memory_space<vmem>>, vector<2x16x8xf32>
    %39 = vector.shape_cast %38 : vector<2x16x8xf32> to vector<32x8xf32>
    %40 = arith.truncf %39 : vector<32x8xf32> to vector<32x8xbf16>
    %c0_47 = arith.constant 0 : index
    %c0_48 = arith.constant 0 : index
    %c0_49 = arith.constant 0 : index
    %41 = vector.load %arg4[%c0_47, %c0_48, %c0_49] : memref<3x8x8xbf16, #tpu.memory_space<vmem>>, vector<1x8x8xbf16>
    %42 = vector.shape_cast %41 : vector<1x8x8xbf16> to vector<8x8xbf16>
    %cst_50 = arith.constant dense<0.000000e+00> : vector<32x8xf32>
    %43 = tpu.matmul %40, %42, %cst_50 {dimension_numbers = #tpu.dot_dimension_numbers<[1], [0], [0], [1], [0, 0, 1, 1], [], []>} : vector<32x8xbf16>, vector<8x8xbf16>, vector<32x8xf32> -> vector<32x8xf32>
    %c0_51 = arith.constant 0 : index
    %c1_52 = arith.constant 1 : index
    %c0_53 = arith.constant 0 : index
    %44 = vector.load %arg8[%c0_51, %c1_52, %c0_53] : memref<2x18x8xf32, #tpu.memory_space<vmem>>, vector<2x16x8xf32>
    %45 = vector.shape_cast %44 : vector<2x16x8xf32> to vector<32x8xf32>
    %46 = arith.truncf %45 : vector<32x8xf32> to vector<32x8xbf16>
    %c1_54 = arith.constant 1 : index
    %c0_55 = arith.constant 0 : index
    %c0_56 = arith.constant 0 : index
    %47 = vector.load %arg4[%c1_54, %c0_55, %c0_56] : memref<3x8x8xbf16, #tpu.memory_space<vmem>>, vector<1x8x8xbf16>
    %48 = vector.shape_cast %47 : vector<1x8x8xbf16> to vector<8x8xbf16>
    %cst_57 = arith.constant dense<0.000000e+00> : vector<32x8xf32>
    %49 = tpu.matmul %46, %48, %cst_57 {dimension_numbers = #tpu.dot_dimension_numbers<[1], [0], [0], [1], [0, 0, 1, 1], [], []>} : vector<32x8xbf16>, vector<8x8xbf16>, vector<32x8xf32> -> vector<32x8xf32>
    %50 = arith.addf %43, %49 : vector<32x8xf32>
    %c0_58 = arith.constant 0 : index
    %c2_59 = arith.constant 2 : index
    %c0_60 = arith.constant 0 : index
    %51 = vector.load %arg8[%c0_58, %c2_59, %c0_60] : memref<2x18x8xf32, #tpu.memory_space<vmem>>, vector<2x16x8xf32>
    %52 = vector.shape_cast %51 : vector<2x16x8xf32> to vector<32x8xf32>
    %53 = arith.truncf %52 : vector<32x8xf32> to vector<32x8xbf16>
    %c2_61 = arith.constant 2 : index
    %c0_62 = arith.constant 0 : index
    %c0_63 = arith.constant 0 : index
    %54 = vector.load %arg4[%c2_61, %c0_62, %c0_63] : memref<3x8x8xbf16, #tpu.memory_space<vmem>>, vector<1x8x8xbf16>
    %55 = vector.shape_cast %54 : vector<1x8x8xbf16> to vector<8x8xbf16>
    %cst_64 = arith.constant dense<0.000000e+00> : vector<32x8xf32>
    %56 = tpu.matmul %53, %55, %cst_64 {dimension_numbers = #tpu.dot_dimension_numbers<[1], [0], [0], [1], [0, 0, 1, 1], [], []>} : vector<32x8xbf16>, vector<8x8xbf16>, vector<32x8xf32> -> vector<32x8xf32>
    %57 = arith.addf %50, %56 : vector<32x8xf32>
    %c0_65 = arith.constant 0 : index
    %c0_66 = arith.constant 0 : index
    %58 = vector.load %arg5[%c0_65, %c0_66] : memref<1x8xf32, #tpu.memory_space<vmem>>, vector<1x8xf32>
    %59 = vector.broadcast %58 : vector<1x8xf32> to vector<32x8xf32>
    %60 = arith.addf %57, %59 : vector<32x8xf32>
    %cst_67 = arith.constant 0.000000e+00 : f32
    %61 = vector.broadcast %cst_67 : f32 to vector<32x8xf32>
    %62 = arith.maximumf %60, %61 : vector<32x8xf32>
    %63 = vector.shape_cast %62 : vector<32x8xf32> to vector<2x16x8xf32>
    %c0_68 = arith.constant 0 : index
    %c1_69 = arith.constant 1 : index
    %c0_70 = arith.constant 0 : index
    %64 = vector.load %arg8[%c0_68, %c1_69, %c0_70] : memref<2x18x8xf32, #tpu.memory_space<vmem>>, vector<2x16x8xf32>
    tpu.vector_store %arg8[%c0_68, %c1_69, %c0_70], %63 {strides = array<i32>} : memref<2x18x8xf32, #tpu.memory_space<vmem>>, vector<2x16x8xf32>,
    %c0_71 = arith.constant 0 : index
    %c0_72 = arith.constant 0 : index
    %c0_73 = arith.constant 0 : index
    %65 = tpu.strided_load %arg8[%c0_71, %c0_72, %c0_73] {strides = array<i32: 1, 2, 1>} : memref<2x18x8xf32, #tpu.memory_space<vmem>>, vector<2x8x8xf32>
    %c0_74 = arith.constant 0 : index
    %c1_75 = arith.constant 1 : index
    %c0_76 = arith.constant 0 : index
    %66 = tpu.strided_load %arg8[%c0_74, %c1_75, %c0_76] {strides = array<i32: 1, 2, 1>} : memref<2x18x8xf32, #tpu.memory_space<vmem>>, vector<2x8x8xf32>
    %c0_77 = arith.constant 0 : index
    %c2_78 = arith.constant 2 : index
    %c0_79 = arith.constant 0 : index
    %67 = tpu.strided_load %arg8[%c0_77, %c2_78, %c0_79] {strides = array<i32: 1, 2, 1>} : memref<2x18x8xf32, #tpu.memory_space<vmem>>, vector<2x8x8xf32>
    %68 = arith.maximumf %65, %66 : vector<2x8x8xf32>
    %69 = arith.maximumf %68, %67 : vector<2x8x8xf32>
    %70 = tpu.transpose %69, [0, 2, 1] : vector<2x8x8xf32> -> vector<2x8x8xf32>
    %c0_80 = arith.constant 0 : index
    %c0_81 = arith.constant 0 : index
    %c0_82 = arith.constant 0 : index
    %71 = vector.load %arg6[%c0_80, %c0_81, %c0_82] : memref<2x8x8xf32, #tpu.memory_space<vmem>>, vector<2x8x8xf32>
    tpu.vector_store %arg6[%c0_80, %c0_81, %c0_82], %70 {strides = array<i32>} : memref<2x8x8xf32, #tpu.memory_space<vmem>>, vector<2x8x8xf32>,
    return
  }
  func.func @transform_0(%arg0: i32) -> (i32, i32, i32) {
    %c0_i32 = arith.constant 0 : i32
    %c0_i32_0 = arith.constant 0 : i32
    %c0_i32_1 = arith.constant 0 : i32
    return %arg0, %c0_i32, %c0_i32_0 : i32, i32, i32
  }
  func.func @transform_1(%arg0: i32) -> (i32, i32, i32) {
    %c0_i32 = arith.constant 0 : i32
    %c0_i32_0 = arith.constant 0 : i32
    %c0_i32_1 = arith.constant 0 : i32
    %c0_i32_2 = arith.constant 0 : i32
    return %c0_i32, %c0_i32_0, %c0_i32_1 : i32, i32, i32
  }
  func.func @transform_2(%arg0: i32) -> (i32, i32) {
    %c0_i32 = arith.constant 0 : i32
    %c0_i32_0 = arith.constant 0 : i32
    %c0_i32_1 = arith.constant 0 : i32
    return %c0_i32, %c0_i32_0 : i32, i32
  }
  func.func @transform_3(%arg0: i32) -> (i32, i32, i32) {
    %c0_i32 = arith.constant 0 : i32
    %c0_i32_0 = arith.constant 0 : i32
    %c0_i32_1 = arith.constant 0 : i32
    %c0_i32_2 = arith.constant 0 : i32
    return %c0_i32, %c0_i32_0, %c0_i32_1 : i32, i32, i32
  }
  func.func @transform_4(%arg0: i32) -> (i32, i32) {
    %c0_i32 = arith.constant 0 : i32
    %c0_i32_0 = arith.constant 0 : i32
    %c0_i32_1 = arith.constant 0 : i32
    return %c0_i32, %c0_i32_0 : i32, i32
  }
  func.func @transform_5(%arg0: i32) -> (i32, i32, i32) {
    %c0_i32 = arith.constant 0 : i32
    %c0_i32_0 = arith.constant 0 : i32
    %c0_i32_1 = arith.constant 0 : i32
    return %arg0, %c0_i32, %c0_i32_0 : i32, i32, i32
  }
}

</mosaic_0001>

<llo_original>
// kernel: tpu_custom_call.1
$region0: #{tpu_custom_call.1}
  #allocation0 [shape = 'u32[]', space=smem, size = 0x4, offset = 0x4, fixed_abs, tag = 'smem constant byte address 0x4 - core index']
  #allocation1 [shape = 'u32[144,128]{1,0:T(1,128)}', space=vmem, size = 0x12000, scoped, tag = 'internal scratch']
  #allocation2 [shape = 'f32[2,18,4]{2,1,0:T(8,128)}', space=vmem, size = 0x6000, scoped, tag = 'scratch operand']
  #allocation3 [shape = 'f32[2,18,8]{2,1,0:T(8,128)}', space=vmem, size = 0x6000, scoped, tag = 'scratch operand']
  %s0 = inlined_call_operand.hbm [shape: f32[2,4,16], index: 0, kind: input, shape index: {}]
  %s1 = inlined_call_operand.hbm [shape: bf16[3,4,8], index: 1, kind: input, shape index: {}]
  %s2 = inlined_call_operand.vmem [shape: f32[1,8], index: 2, kind: input, shape index: {}]
  %s3 = inlined_call_operand.hbm [shape: bf16[3,8,8], index: 3, kind: input, shape index: {}]
  %s4 = inlined_call_operand.vmem [shape: f32[1,8], index: 4, kind: input, shape index: {}]
  %s5 = inlined_call_operand.hbm [shape: f32[2,8,8], index: 5, kind: output, shape index: {}]
  %s6 = sld [smem:[#allocation0]]
  $region42: #{tpu_custom_call.1} parent=0
    _
  %s8 = ssub.s32 1, %s6
  %s9 = scalar_select 0, %s8, %s6
  $region1: #{tpu_custom_call.1} parent=0
    #allocation4 [shape = 'u8[4096]{0}', space=vmem, size = 0x1000, scoped, tag = 'input window, operand 0, single buffered']
    #allocation5 [shape = 's32[1]{0}', space=sflag, size = 0x4, scoped, tag = 'scoped memory for tpu_custom_call.1']
    #allocation6 [shape = 's32[1]{0}', space=sflag, size = 0x4, scoped, tag = 'scoped memory for tpu_custom_call.1']
    #allocation7 [shape = 'u8[3072]{0}', space=vmem, size = 0xc00, scoped, tag = 'input window, operand 1, single buffered']
    #allocation8 [shape = 's32[1]{0}', space=sflag, size = 0x4, scoped, tag = 'scoped memory for tpu_custom_call.1']
    #allocation9 [shape = 'u8[6144]{0}', space=vmem, size = 0x1800, scoped, tag = 'input window, operand 3, single buffered']
    #allocation10 [shape = 'u8[8192]{0}', space=vmem, size = 0x2000, scoped, tag = 'output window, operand 0, single buffered']
    %10 = vsyncpa [#allocation5], 0
    %11 = vsyncpa [#allocation8], 0
    %12 = vsyncpa [#allocation6], 0
    // Predicated region
    $region2: #{tpu_custom_call.1} parent=1 // pred_check
      _
    $region3: #{tpu_custom_call.1} parent=1 // pred_check_branch
      %14 = sbr.rel (0) target = $region5
    $region4: #{tpu_custom_call.1} parent=1 // pred_region
      %s16 = ssub.s32 128, 128
      %17 = vsyncadd [#allocation5], %s16
      %s18 = sshll.u32 [#allocation4], 4
      %s19 = int_to_ptr.vmem [resolvable:$true] %s18
      %24 = dma.hbm_to_vmem [thread:$0]  %s0, 128, %s19, [#allocation5], 64, 64, 4
    $region5: #{tpu_custom_call.1} parent=1 // pred_fallthru
      _
    // Predicated region
    $region6: #{tpu_custom_call.1} parent=1 // pred_check
      _
    $region7: #{tpu_custom_call.1} parent=1 // pred_check_branch
      %26 = sbr.rel (0) target = $region9
    $region8: #{tpu_custom_call.1} parent=1 // pred_region
      %s28 = ssub.s32 96, 96
      %29 = vsyncadd [#allocation8], %s28
      %s30 = sshll.u32 [#allocation7], 4
      %s31 = int_to_ptr.vmem [resolvable:$true] %s30
      %36 = dma.hbm_to_vmem [thread:$0]  %s1, 96, %s31, [#allocation8], 32, 32, 2
    $region9: #{tpu_custom_call.1} parent=1 // pred_fallthru
      _
    // Predicated region
    $region10: #{tpu_custom_call.1} parent=1 // pred_check
      _
    $region11: #{tpu_custom_call.1} parent=1 // pred_check_branch
      %38 = sbr.rel (0) target = $region13
    $region12: #{tpu_custom_call.1} parent=1 // pred_region
      _
    $region13: #{tpu_custom_call.1} parent=1 // pred_fallthru
      _
    // Predicated region
    $region14: #{tpu_custom_call.1} parent=1 // pred_check
      _
    $region15: #{tpu_custom_call.1} parent=1 // pred_check_branch
      %40 = sbr.rel (0) target = $region17
    $region16: #{tpu_custom_call.1} parent=1 // pred_region
      %s42 = ssub.s32 192, 192
      %43 = vsyncadd [#allocation8], %s42
      %s44 = sshll.u32 [#allocation9], 4
      %s45 = int_to_ptr.vmem [resolvable:$true] %s44
      %50 = dma.hbm_to_vmem [thread:$0]  %s3, 192, %s45, [#allocation8], 64, 64, 4
    $region17: #{tpu_custom_call.1} parent=1 // pred_fallthru
      _
    // Predicated region
    $region18: #{tpu_custom_call.1} parent=1 // pred_check
      _
    $region19: #{tpu_custom_call.1} parent=1 // pred_check_branch
      %52 = sbr.rel (0) target = $region21
    $region20: #{tpu_custom_call.1} parent=1 // pred_region
      _
    $region21: #{tpu_custom_call.1} parent=1 // pred_fallthru
      _
    // Predicated region
    $region22: #{tpu_custom_call.1} parent=1 // pred_check
      _
    $region23: #{tpu_custom_call.1} parent=1 // pred_check_branch
      %54 = sbr.rel (0) target = $region25
    $region24: #{tpu_custom_call.1} parent=1 // pred_region
      %55 = dma.done [#allocation5], 128
    $region25: #{tpu_custom_call.1} parent=1 // pred_fallthru
      _
    // Predicated region
    $region26: #{tpu_custom_call.1} parent=1 // pred_check
      _
    $region27: #{tpu_custom_call.1} parent=1 // pred_check_branch
      %57 = sbr.rel (0) target = $region29
    $region28: #{tpu_custom_call.1} parent=1 // pred_region
      %58 = dma.done [#allocation8], 96
    $region29: #{tpu_custom_call.1} parent=1 // pred_fallthru
      _
    // Predicated region
    $region30: #{tpu_custom_call.1} parent=1 // pred_check
      _
    $region31: #{tpu_custom_call.1} parent=1 // pred_check_branch
      %60 = sbr.rel (0) target = $region33
    $region32: #{tpu_custom_call.1} parent=1 // pred_region
      %61 = dma.done [#allocation8], 192
    $region33: #{tpu_custom_call.1} parent=1 // pred_fallthru
      _
    %vm63 = vcmask 24576
    %64 = vst.msk [vmem:[#allocation2] sm:$0x1] %vm63, 0.0
    %65 = vst.msk [vmem:[#allocation2 + $0x18] sm:$0x1] %vm63, 0.0
    %66 = vst.msk [vmem:[#allocation2 + $0x11] sm:$0x1] %vm63, 0.0
    %67 = vst.msk [vmem:[#allocation2 + $0x29] sm:$0x1] %vm63, 0.0
    %v68 = vld [vmem:[#allocation4] sm:$0xf]
    %v69 = vld [vmem:[#allocation4 + $0x4] sm:$0xf]
    %70 = vxpose.xlu0.b32.start [1/16] %v68, 128
    %71 = vxpose.xlu0.b32.cont [2/16] 0.0, 128
    %72 = vxpose.xlu0.b32.cont [3/16] 0.0, 128
    %73 = vxpose.xlu0.b32.cont [4/16] 0.0, 128
    %74 = vxpose.xlu0.b32.cont [5/16] 0.0, 128
    %75 = vxpose.xlu0.b32.cont [6/16] 0.0, 128
    %76 = vxpose.xlu0.b32.cont [7/16] 0.0, 128
    %77 = vxpose.xlu0.b32.cont [8/16] 0.0, 128
    %78 = vxpose.xlu0.b32.cont [9/16] 0.0, 128
    %79 = vxpose.xlu0.b32.cont [10/16] 0.0, 128
    %80 = vxpose.xlu0.b32.cont [11/16] 0.0, 128
    %81 = vxpose.xlu0.b32.cont [12/16] 0.0, 128
    %82 = vxpose.xlu0.b32.cont [13/16] 0.0, 128
    %83 = vxpose.xlu0.b32.cont [14/16] 0.0, 128
    %84 = vxpose.xlu0.b32.cont [15/16] 0.0, 128
    %85 = vxpose.xlu0.b32.end [16/16] 0.0, 128
    %v86 = vpop.trf.xlu0
    %v87 = vpop.trf.xlu0
    %v88 = vpop.trf.xlu0
    %v89 = vpop.trf.xlu0
    %v90 = vpop.trf.xlu0
    %v91 = vpop.trf.xlu0
    %v92 = vpop.trf.xlu0
    %v93 = vpop.trf.xlu0
    %v94 = vpop.trf.xlu0
    %v95 = vpop.trf.xlu0
    %v96 = vpop.trf.xlu0
    %v97 = vpop.trf.xlu0
    %v98 = vpop.trf.xlu0
    %v99 = vpop.trf.xlu0
    %v100 = vpop.trf.xlu0
    %v101 = vpop.trf.xlu0
    %102 = vxpose.xlu0.b32.start [1/16] %v69, 128
    %103 = vxpose.xlu0.b32.cont [2/16] 0.0, 128
    %104 = vxpose.xlu0.b32.cont [3/16] 0.0, 128
    %105 = vxpose.xlu0.b32.cont [4/16] 0.0, 128
    %106 = vxpose.xlu0.b32.cont [5/16] 0.0, 128
    %107 = vxpose.xlu0.b32.cont [6/16] 0.0, 128
    %108 = vxpose.xlu0.b32.cont [7/16] 0.0, 128
    %109 = vxpose.xlu0.b32.cont [8/16] 0.0, 128
    %110 = vxpose.xlu0.b32.cont [9/16] 0.0, 128
    %111 = vxpose.xlu0.b32.cont [10/16] 0.0, 128
    %112 = vxpose.xlu0.b32.cont [11/16] 0.0, 128
    %113 = vxpose.xlu0.b32.cont [12/16] 0.0, 128
    %114 = vxpose.xlu0.b32.cont [13/16] 0.0, 128
    %115 = vxpose.xlu0.b32.cont [14/16] 0.0, 128
    %116 = vxpose.xlu0.b32.cont [15/16] 0.0, 128
    %117 = vxpose.xlu0.b32.end [16/16] 0.0, 128
    %v118 = vpop.trf.xlu0
    %v119 = vpop.trf.xlu0
    %v120 = vpop.trf.xlu0
    %v121 = vpop.trf.xlu0
    %v122 = vpop.trf.xlu0
    %v123 = vpop.trf.xlu0
    %v124 = vpop.trf.xlu0
    %v125 = vpop.trf.xlu0
    %v126 = vpop.trf.xlu0
    %v127 = vpop.trf.xlu0
    %v128 = vpop.trf.xlu0
    %v129 = vpop.trf.xlu0
    %v130 = vpop.trf.xlu0
    %v131 = vpop.trf.xlu0
    %v132 = vpop.trf.xlu0
    %v133 = vpop.trf.xlu0
    %vm134 = vcmask 31744
    %135 = vst.msk [vmem:[#allocation2 + $0x1] sm:$0xff] %vm134, %v86
    %136 = vst.msk [vmem:[#allocation2 + $0x9] sm:$0xff] %vm134, %v87
    %137 = vst.msk [vmem:[#allocation2 + $0x19] sm:$0xff] %vm134, %v118
    %138 = vst.msk [vmem:[#allocation2 + $0x21] sm:$0xff] %vm134, %v119
    %v139 = vld [vmem:[#allocation2] sm:$0xff]
    %v140 = vld [vmem:[#allocation2 + $0x8] sm:$0xff]
    %v141 = vld [vmem:[#allocation2 + $0x18] sm:$0xff]
    %v142 = vld [vmem:[#allocation2 + $0x20] sm:$0xff]
    %v143 = vpack.c.bf16 %v140, %v139
    %v144 = vpack.c.bf16 %v142, %v141
    %v145 = vld [vmem:[#allocation7] sm:$0x3]
    %v146 = vld [vmem:[#allocation2 + $0x1] sm:$0xff]
    %v147 = vld [vmem:[#allocation2 + $0x9] sm:$0xff]
    %v148 = vld [vmem:[#allocation2 + $0x19] sm:$0xff]
    %v149 = vld [vmem:[#allocation2 + $0x21] sm:$0xff]
    %v150 = vpack.c.bf16 %v147, %v146
    %v151 = vpack.c.bf16 %v149, %v148
    %s152 = scalar_lea.vmem [#allocation7], 2
    %v153 = vld [vmem:[%s152] sm:$0x3]
    %v155 = vsel %vm134, %v150, 0
    %v158 = vsel %vm134, %v151, 0
    %vm160 = vcmask 1041408
    %v162 = vsel %vm160, %v153, 0
    %164 = vmatprep.subr.bf16.mxu0 0
    %165 = vmatpush1.bf16.msra.mxu0 %v162
    %166 = vmatprep.subr.bf16.mxu0 0
    %167 = vmatpush1.bf16.msra.mxu0 0
    %168 = vmatprep.subr.bf16.mxu0 0
    %169 = vmatpush1.bf16.msra.mxu0 0
    %170 = vmatprep.subr.bf16.mxu0 0
    %171 = vmatpush1.bf16.msra.mxu0 0
    %172 = vmatprep.subr.bf16.mxu0 0
    %173 = vmatpush1.bf16.msra.mxu0 0
    %174 = vmatprep.subr.bf16.mxu0 0
    %175 = vmatpush1.bf16.msra.mxu0 0
    %176 = vmatprep.subr.bf16.mxu0 0
    %177 = vmatpush1.bf16.msra.mxu0 0
    %178 = vmatprep.subr.bf16.mxu0 0
    %179 = vmatpush1.bf16.msra.mxu0 0
    %180 = vmatprep.subr.bf16.mxu0 0
    %181 = vmatpush1.bf16.msra.mxu0 0
    %182 = vmatprep.subr.bf16.mxu0 0
    %183 = vmatpush1.bf16.msra.mxu0 0
    %184 = vmatprep.subr.bf16.mxu0 0
    %185 = vmatpush1.bf16.msra.mxu0 0
    %186 = vmatprep.subr.bf16.mxu0 0
    %187 = vmatpush1.bf16.msra.mxu0 0
    %188 = vmatprep.subr.bf16.mxu0 0
    %189 = vmatpush1.bf16.msra.mxu0 0
    %190 = vmatprep.subr.bf16.mxu0 0
    %191 = vmatpush1.bf16.msra.mxu0 0
    %192 = vmatprep.subr.bf16.mxu0 0
    %193 = vmatpush1.bf16.msra.mxu0 0
    %194 = vmatprep.subr.bf16.mxu0 0
    %195 = vmatpush1.bf16.msra.mxu0 0
    %196 = vmatprep.mubr.bf16.mxu0 0
    %197 = vmatmul.mubr.bf16.gmra.mrb[0].mxu0 %v155
    %v198 = vpop.f32.mrb[0].mxu0
    %v199 = vadd.f32 0.0, %v198
    %v200 = vpop.f32.mrb[0].mxu0
    %v201 = vpop.f32.mrb[0].mxu0
    %v202 = vadd.f32 0.0, %v201
    %v203 = vpop.f32.mrb[0].mxu0
    %204 = vmatprep.mubr.bf16.mxu0 0
    %205 = vmatmul.mubr.bf16.gmra.mrb[0].mxu0 %v158
    %v206 = vpop.f32.mrb[0].mxu0
    %v207 = vadd.f32 0.0, %v206
    %v208 = vpop.f32.mrb[0].mxu0
    %v209 = vpop.f32.mrb[0].mxu0
    %v210 = vadd.f32 0.0, %v209
    %v211 = vpop.f32.mrb[0].mxu0
    %212 = vdwg.mxu0
    %v214 = vsel %vm134, %v143, 0
    %v217 = vsel %vm134, %v144, 0
    %v220 = vsel %vm160, %v145, 0
    %222 = vmatprep.subr.bf16.mxu0 0
    %223 = vmatpush1.bf16.msra.mxu0 %v220
    %224 = vmatprep.subr.bf16.mxu0 0
    %225 = vmatpush1.bf16.msra.mxu0 0
    %226 = vmatprep.subr.bf16.mxu0 0
    %227 = vmatpush1.bf16.msra.mxu0 0
    %228 = vmatprep.subr.bf16.mxu0 0
    %229 = vmatpush1.bf16.msra.mxu0 0
    %230 = vmatprep.subr.bf16.mxu0 0
    %231 = vmatpush1.bf16.msra.mxu0 0
    %232 = vmatprep.subr.bf16.mxu0 0
    %233 = vmatpush1.bf16.msra.mxu0 0
    %234 = vmatprep.subr.bf16.mxu0 0
    %235 = vmatpush1.bf16.msra.mxu0 0
    %236 = vmatprep.subr.bf16.mxu0 0
    %237 = vmatpush1.bf16.msra.mxu0 0
    %238 = vmatprep.subr.bf16.mxu0 0
    %239 = vmatpush1.bf16.msra.mxu0 0
    %240 = vmatprep.subr.bf16.mxu0 0
    %241 = vmatpush1.bf16.msra.mxu0 0
    %242 = vmatprep.subr.bf16.mxu0 0
    %243 = vmatpush1.bf16.msra.mxu0 0
    %244 = vmatprep.subr.bf16.mxu0 0
    %245 = vmatpush1.bf16.msra.mxu0 0
    %246 = vmatprep.subr.bf16.mxu0 0
    %247 = vmatpush1.bf16.msra.mxu0 0
    %248 = vmatprep.subr.bf16.mxu0 0
    %249 = vmatpush1.bf16.msra.mxu0 0
    %250 = vmatprep.subr.bf16.mxu0 0
    %251 = vmatpush1.bf16.msra.mxu0 0
    %252 = vmatprep.subr.bf16.mxu0 0
    %253 = vmatpush1.bf16.msra.mxu0 0
    %254 = vmatprep.mubr.bf16.mxu0 0
    %255 = vmatmul.mubr.bf16.gmra.mrb[0].mxu0 %v214
    %v256 = vpop.f32.mrb[0].mxu0
    %v257 = vadd.f32 %v199, %v256
    %v258 = vpop.f32.mrb[0].mxu0
    %v259 = vpop.f32.mrb[0].mxu0
    %v260 = vadd.f32 %v202, %v259
    %v261 = vpop.f32.mrb[0].mxu0
    %262 = vmatprep.mubr.bf16.mxu0 0
    %263 = vmatmul.mubr.bf16.gmra.mrb[0].mxu0 %v217
    %v264 = vpop.f32.mrb[0].mxu0
    %v265 = vadd.f32 %v207, %v264
    %v266 = vpop.f32.mrb[0].mxu0
    %v267 = vpop.f32.mrb[0].mxu0
    %v268 = vadd.f32 %v210, %v267
    %v269 = vpop.f32.mrb[0].mxu0
    %270 = vdwg.mxu0
    %v271 = vld [vmem:[#allocation2 + $0x2] sm:$0xff]
    %v272 = vld [vmem:[#allocation2 + $0xa] sm:$0xff]
    %v273 = vld [vmem:[#allocation2 + $0x1a] sm:$0xff]
    %v274 = vld [vmem:[#allocation2 + $0x22] sm:$0xff]
    %v275 = vpack.c.bf16 %v272, %v271
    %v276 = vpack.c.bf16 %v274, %v273
    %s277 = scalar_lea.vmem [#allocation7], 4
    %v278 = vld [vmem:[%s277] sm:$0x3]
    %v280 = vsel %vm134, %v275, 0
    %v283 = vsel %vm134, %v276, 0
    %v286 = vsel %vm160, %v278, 0
    %288 = vmatprep.subr.bf16.mxu0 0
    %289 = vmatpush1.bf16.msra.mxu0 %v286
    %290 = vmatprep.subr.bf16.mxu0 0
    %291 = vmatpush1.bf16.msra.mxu0 0
    %292 = vmatprep.subr.bf16.mxu0 0
    %293 = vmatpush1.bf16.msra.mxu0 0
    %294 = vmatprep.subr.bf16.mxu0 0
    %295 = vmatpush1.bf16.msra.mxu0 0
    %296 = vmatprep.subr.bf16.mxu0 0
    %297 = vmatpush1.bf16.msra.mxu0 0
    %298 = vmatprep.subr.bf16.mxu0 0
    %299 = vmatpush1.bf16.msra.mxu0 0
    %300 = vmatprep.subr.bf16.mxu0 0
    %301 = vmatpush1.bf16.msra.mxu0 0
    %302 = vmatprep.subr.bf16.mxu0 0
    %303 = vmatpush1.bf16.msra.mxu0 0
    %304 = vmatprep.subr.bf16.mxu0 0
    %305 = vmatpush1.bf16.msra.mxu0 0
    %306 = vmatprep.subr.bf16.mxu0 0
    %307 = vmatpush1.bf16.msra.mxu0 0
    %308 = vmatprep.subr.bf16.mxu0 0
    %309 = vmatpush1.bf16.msra.mxu0 0
    %310 = vmatprep.subr.bf16.mxu0 0
    %311 = vmatpush1.bf16.msra.mxu0 0
    %312 = vmatprep.subr.bf16.mxu0 0
    %313 = vmatpush1.bf16.msra.mxu0 0
    %314 = vmatprep.subr.bf16.mxu0 0
    %315 = vmatpush1.bf16.msra.mxu0 0
    %316 = vmatprep.subr.bf16.mxu0 0
    %317 = vmatpush1.bf16.msra.mxu0 0
    %318 = vmatprep.subr.bf16.mxu0 0
    %319 = vmatpush1.bf16.msra.mxu0 0
    %320 = vmatprep.mubr.bf16.mxu0 0
    %321 = vmatmul.mubr.bf16.gmra.mrb[0].mxu0 %v280
    %v322 = vpop.f32.mrb[0].mxu0
    %v323 = vadd.f32 0.0, %v322
    %v324 = vpop.f32.mrb[0].mxu0
    %v325 = vpop.f32.mrb[0].mxu0
    %v326 = vadd.f32 0.0, %v325
    %v327 = vpop.f32.mrb[0].mxu0
    %328 = vmatprep.mubr.bf16.mxu0 0
    %329 = vmatmul.mubr.bf16.gmra.mrb[0].mxu0 %v283
    %v330 = vpop.f32.mrb[0].mxu0
    %v331 = vadd.f32 0.0, %v330
    %v332 = vpop.f32.mrb[0].mxu0
    %v333 = vpop.f32.mrb[0].mxu0
    %v334 = vadd.f32 0.0, %v333
    %v335 = vpop.f32.mrb[0].mxu0
    %336 = vdwg.mxu0
    %v337 = vadd.f32 %v257, %v323
    %v338 = vadd.f32 %v260, %v326
    %v339 = vadd.f32 %v265, %v331
    %v340 = vadd.f32 %v268, %v334
    %v341 = vld [vmem:[%s2] sm:$0x1]
    %v343 = vlaneseq
    %v344 = vshrl.u32 %v343, 7
    %v345 = vsub.s32 0, %v344
    %v346 = vrot.slane %v341, %v345
    %v348 = vadd.f32 %v337, %v346
    %v349 = vadd.f32 %v338, %v346
    %v350 = vadd.f32 %v339, %v346
    %v351 = vadd.f32 %v340, %v346
    %v352 = vmax.f32 %v348, 0.0
    %v353 = vmax.f32 %v349, 0.0
    %v354 = vmax.f32 %v350, 0.0
    %v355 = vmax.f32 %v351, 0.0
    %vm356 = vcmask 57344
    %357 = vst.msk [vmem:[#allocation3] sm:$0x1] %vm356, 0.0
    %358 = vst.msk [vmem:[#allocation3 + $0x18] sm:$0x1] %vm356, 0.0
    %359 = vst.msk [vmem:[#allocation3 + $0x11] sm:$0x1] %vm356, 0.0
    %360 = vst.msk [vmem:[#allocation3 + $0x29] sm:$0x1] %vm356, 0.0
    %vm361 = vcmask 64512
    %362 = vst.msk [vmem:[#allocation3 + $0x1] sm:$0xff] %vm361, %v352
    %363 = vst.msk [vmem:[#allocation3 + $0x9] sm:$0xff] %vm361, %v353
    %364 = vst.msk [vmem:[#allocation3 + $0x19] sm:$0xff] %vm361, %v354
    %365 = vst.msk [vmem:[#allocation3 + $0x21] sm:$0xff] %vm361, %v355
    %v366 = vld [vmem:[#allocation3] sm:$0xff]
    %v367 = vld [vmem:[#allocation3 + $0x8] sm:$0xff]
    %v368 = vld [vmem:[#allocation3 + $0x18] sm:$0xff]
    %v369 = vld [vmem:[#allocation3 + $0x20] sm:$0xff]
    %v370 = vpack.c.bf16 %v367, %v366
    %v371 = vpack.c.bf16 %v369, %v368
    %v372 = vld [vmem:[#allocation9] sm:$0xf]
    %v373 = vld [vmem:[#allocation3 + $0x1] sm:$0xff]
    %v374 = vld [vmem:[#allocation3 + $0x9] sm:$0xff]
    %v375 = vld [vmem:[#allocation3 + $0x19] sm:$0xff]
    %v376 = vld [vmem:[#allocation3 + $0x21] sm:$0xff]
    %v377 = vpack.c.bf16 %v374, %v373
    %v378 = vpack.c.bf16 %v376, %v375
    %s379 = scalar_lea.vmem [#allocation9], 4
    %v380 = vld [vmem:[%s379] sm:$0xf]
    %v382 = vsel %vm361, %v377, 0
    %v385 = vsel %vm361, %v378, 0
    %vm387 = vcmask 1043456
    %v389 = vsel %vm387, %v380, 0
    %391 = vmatprep.subr.bf16.mxu0 0
    %392 = vmatpush1.bf16.msra.mxu0 %v389
    %393 = vmatprep.subr.bf16.mxu0 0
    %394 = vmatpush1.bf16.msra.mxu0 0
    %395 = vmatprep.subr.bf16.mxu0 0
    %396 = vmatpush1.bf16.msra.mxu0 0
    %397 = vmatprep.subr.bf16.mxu0 0
    %398 = vmatpush1.bf16.msra.mxu0 0
    %399 = vmatprep.subr.bf16.mxu0 0
    %400 = vmatpush1.bf16.msra.mxu0 0
    %401 = vmatprep.subr.bf16.mxu0 0
    %402 = vmatpush1.bf16.msra.mxu0 0
    %403 = vmatprep.subr.bf16.mxu0 0
    %404 = vmatpush1.bf16.msra.mxu0 0
    %405 = vmatprep.subr.bf16.mxu0 0
    %406 = vmatpush1.bf16.msra.mxu0 0
    %407 = vmatprep.subr.bf16.mxu0 0
    %408 = vmatpush1.bf16.msra.mxu0 0
    %409 = vmatprep.subr.bf16.mxu0 0
    %410 = vmatpush1.bf16.msra.mxu0 0
    %411 = vmatprep.subr.bf16.mxu0 0
    %412 = vmatpush1.bf16.msra.mxu0 0
    %413 = vmatprep.subr.bf16.mxu0 0
    %414 = vmatpush1.bf16.msra.mxu0 0
    %415 = vmatprep.subr.bf16.mxu0 0
    %416 = vmatpush1.bf16.msra.mxu0 0
    %417 = vmatprep.subr.bf16.mxu0 0
    %418 = vmatpush1.bf16.msra.mxu0 0
    %419 = vmatprep.subr.bf16.mxu0 0
    %420 = vmatpush1.bf16.msra.mxu0 0
    %421 = vmatprep.subr.bf16.mxu0 0
    %422 = vmatpush1.bf16.msra.mxu0 0
    %423 = vmatprep.mubr.bf16.mxu0 0
    %424 = vmatmul.mubr.bf16.gmra.mrb[0].mxu0 %v382
    %v425 = vpop.f32.mrb[0].mxu0
    %v426 = vadd.f32 0.0, %v425
    %v427 = vpop.f32.mrb[0].mxu0
    %v428 = vpop.f32.mrb[0].mxu0
    %v429 = vadd.f32 0.0, %v428
    %v430 = vpop.f32.mrb[0].mxu0
    %431 = vmatprep.mubr.bf16.mxu0 0
    %432 = vmatmul.mubr.bf16.gmra.mrb[0].mxu0 %v385
    %v433 = vpop.f32.mrb[0].mxu0
    %v434 = vadd.f32 0.0, %v433
    %v435 = vpop.f32.mrb[0].mxu0
    %v436 = vpop.f32.mrb[0].mxu0
    %v437 = vadd.f32 0.0, %v436
    %v438 = vpop.f32.mrb[0].mxu0
    %439 = vdwg.mxu0
    %v441 = vsel %vm361, %v370, 0
    %v444 = vsel %vm361, %v371, 0
    %v447 = vsel %vm387, %v372, 0
    %449 = vmatprep.subr.bf16.mxu0 0
    %450 = vmatpush1.bf16.msra.mxu0 %v447
    %451 = vmatprep.subr.bf16.mxu0 0
    %452 = vmatpush1.bf16.msra.mxu0 0
    %453 = vmatprep.subr.bf16.mxu0 0
    %454 = vmatpush1.bf16.msra.mxu0 0
    %455 = vmatprep.subr.bf16.mxu0 0
    %456 = vmatpush1.bf16.msra.mxu0 0
    %457 = vmatprep.subr.bf16.mxu0 0
    %458 = vmatpush1.bf16.msra.mxu0 0
    %459 = vmatprep.subr.bf16.mxu0 0
    %460 = vmatpush1.bf16.msra.mxu0 0
    %461 = vmatprep.subr.bf16.mxu0 0
    %462 = vmatpush1.bf16.msra.mxu0 0
    %463 = vmatprep.subr.bf16.mxu0 0
    %464 = vmatpush1.bf16.msra.mxu0 0
    %465 = vmatprep.subr.bf16.mxu0 0
    %466 = vmatpush1.bf16.msra.mxu0 0
    %467 = vmatprep.subr.bf16.mxu0 0
    %468 = vmatpush1.bf16.msra.mxu0 0
    %469 = vmatprep.subr.bf16.mxu0 0
    %470 = vmatpush1.bf16.msra.mxu0 0
    %471 = vmatprep.subr.bf16.mxu0 0
    %472 = vmatpush1.bf16.msra.mxu0 0
    %473 = vmatprep.subr.bf16.mxu0 0
    %474 = vmatpush1.bf16.msra.mxu0 0
    %475 = vmatprep.subr.bf16.mxu0 0
    %476 = vmatpush1.bf16.msra.mxu0 0
    %477 = vmatprep.subr.bf16.mxu0 0
    %478 = vmatpush1.bf16.msra.mxu0 0
    %479 = vmatprep.subr.bf16.mxu0 0
    %480 = vmatpush1.bf16.msra.mxu0 0
    %481 = vmatprep.mubr.bf16.mxu0 0
    %482 = vmatmul.mubr.bf16.gmra.mrb[0].mxu0 %v441
    %v483 = vpop.f32.mrb[0].mxu0
    %v484 = vadd.f32 %v426, %v483
    %v485 = vpop.f32.mrb[0].mxu0
    %v486 = vpop.f32.mrb[0].mxu0
    %v487 = vadd.f32 %v429, %v486
    %v488 = vpop.f32.mrb[0].mxu0
    %489 = vmatprep.mubr.bf16.mxu0 0
    %490 = vmatmul.mubr.bf16.gmra.mrb[0].mxu0 %v444
    %v491 = vpop.f32.mrb[0].mxu0
    %v492 = vadd.f32 %v434, %v491
    %v493 = vpop.f32.mrb[0].mxu0
    %v494 = vpop.f32.mrb[0].mxu0
    %v495 = vadd.f32 %v437, %v494
    %v496 = vpop.f32.mrb[0].mxu0
    %497 = vdwg.mxu0
    %v498 = vld [vmem:[#allocation3 + $0x2] sm:$0xff]
    %v499 = vld [vmem:[#allocation3 + $0xa] sm:$0xff]
    %v500 = vld [vmem:[#allocation3 + $0x1a] sm:$0xff]
    %v501 = vld [vmem:[#allocation3 + $0x22] sm:$0xff]
    %v502 = vpack.c.bf16 %v499, %v498
    %v503 = vpack.c.bf16 %v501, %v500
    %s504 = scalar_lea.vmem [#allocation9], 8
    %v505 = vld [vmem:[%s504] sm:$0xf]
    %v507 = vsel %vm361, %v502, 0
    %v510 = vsel %vm361, %v503, 0
    %v513 = vsel %vm387, %v505, 0
    %515 = vmatprep.subr.bf16.mxu0 0
    %516 = vmatpush1.bf16.msra.mxu0 %v513
    %517 = vmatprep.subr.bf16.mxu0 0
    %518 = vmatpush1.bf16.msra.mxu0 0
    %519 = vmatprep.subr.bf16.mxu0 0
    %520 = vmatpush1.bf16.msra.mxu0 0
    %521 = vmatprep.subr.bf16.mxu0 0
    %522 = vmatpush1.bf16.msra.mxu0 0
    %523 = vmatprep.subr.bf16.mxu0 0
    %524 = vmatpush1.bf16.msra.mxu0 0
    %525 = vmatprep.subr.bf16.mxu0 0
    %526 = vmatpush1.bf16.msra.mxu0 0
    %527 = vmatprep.subr.bf16.mxu0 0
    %528 = vmatpush1.bf16.msra.mxu0 0
    %529 = vmatprep.subr.bf16.mxu0 0
    %530 = vmatpush1.bf16.msra.mxu0 0
    %531 = vmatprep.subr.bf16.mxu0 0
    %532 = vmatpush1.bf16.msra.mxu0 0
    %533 = vmatprep.subr.bf16.mxu0 0
    %534 = vmatpush1.bf16.msra.mxu0 0
    %535 = vmatprep.subr.bf16.mxu0 0
    %536 = vmatpush1.bf16.msra.mxu0 0
    %537 = vmatprep.subr.bf16.mxu0 0
    %538 = vmatpush1.bf16.msra.mxu0 0
    %539 = vmatprep.subr.bf16.mxu0 0
    %540 = vmatpush1.bf16.msra.mxu0 0
    %541 = vmatprep.subr.bf16.mxu0 0
    %542 = vmatpush1.bf16.msra.mxu0 0
    %543 = vmatprep.subr.bf16.mxu0 0
    %544 = vmatpush1.bf16.msra.mxu0 0
    %545 = vmatprep.subr.bf16.mxu0 0
    %546 = vmatpush1.bf16.msra.mxu0 0
    %547 = vmatprep.mubr.bf16.mxu0 0
    %548 = vmatmul.mubr.bf16.gmra.mrb[0].mxu0 %v507
    %v549 = vpop.f32.mrb[0].mxu0
    %v550 = vadd.f32 0.0, %v549
    %v551 = vpop.f32.mrb[0].mxu0
    %v552 = vpop.f32.mrb[0].mxu0
    %v553 = vadd.f32 0.0, %v552
    %v554 = vpop.f32.mrb[0].mxu0
    %555 = vmatprep.mubr.bf16.mxu0 0
    %556 = vmatmul.mubr.bf16.gmra.mrb[0].mxu0 %v510
    %v557 = vpop.f32.mrb[0].mxu0
    %v558 = vadd.f32 0.0, %v557
    %v559 = vpop.f32.mrb[0].mxu0
    %v560 = vpop.f32.mrb[0].mxu0
    %v561 = vadd.f32 0.0, %v560
    %v562 = vpop.f32.mrb[0].mxu0
    %563 = vdwg.mxu0
    %v564 = vadd.f32 %v484, %v550
    %v565 = vadd.f32 %v487, %v553
    %v566 = vadd.f32 %v492, %v558
    %v567 = vadd.f32 %v495, %v561
    %v568 = vld [vmem:[%s4] sm:$0x1]
    %v570 = vlaneseq
    %v571 = vshrl.u32 %v570, 7
    %v572 = vsub.s32 0, %v571
    %v573 = vrot.slane %v568, %v572
    %v575 = vadd.f32 %v564, %v573
    %v576 = vadd.f32 %v565, %v573
    %v577 = vadd.f32 %v566, %v573
    %v578 = vadd.f32 %v567, %v573
    %v579 = vmax.f32 %v575, 0.0
    %v580 = vmax.f32 %v576, 0.0
    %v581 = vmax.f32 %v577, 0.0
    %v582 = vmax.f32 %v578, 0.0
    %583 = vst.msk [vmem:[#allocation3 + $0x1] sm:$0xff] %vm361, %v579
    %584 = vst.msk [vmem:[#allocation3 + $0x9] sm:$0xff] %vm361, %v580
    %585 = vst.msk [vmem:[#allocation3 + $0x19] sm:$0xff] %vm361, %v581
    %586 = vst.msk [vmem:[#allocation3 + $0x21] sm:$0xff] %vm361, %v582
    %v587 = vld [vmem:[#allocation3] ss:$2 sm:$0xff]
    %s588 = scalar_lea.vmem [#allocation3], 24
    %v589 = vld [vmem:[%s588] ss:$2 sm:$0xff]
    %s590 = scalar_lea.vmem [#allocation3], 1
    %v591 = vld [vmem:[%s590] ss:$2 sm:$0xff]
    %s592 = scalar_lea.vmem [#allocation3], 25
    %v593 = vld [vmem:[%s592] ss:$2 sm:$0xff]
    %s594 = scalar_lea.vmem [#allocation3], 2
    %v595 = vld [vmem:[%s594] ss:$2 sm:$0xff]
    %s596 = scalar_lea.vmem [#allocation3], 26
    %v597 = vld [vmem:[%s596] ss:$2 sm:$0xff]
    %v598 = vmax.f32 %v587, %v591
    %v599 = vmax.f32 %v589, %v593
    %v600 = vmax.f32 %v598, %v595
    %v601 = vmax.f32 %v599, %v597
    %602 = vxpose.xlu0.b32.start [1/16] %v600, 128
    %603 = vxpose.xlu0.b32.cont [2/16] 0.0, 128
    %604 = vxpose.xlu0.b32.cont [3/16] 0.0, 128
    %605 = vxpose.xlu0.b32.cont [4/16] 0.0, 128
    %606 = vxpose.xlu0.b32.cont [5/16] 0.0, 128
    %607 = vxpose.xlu0.b32.cont [6/16] 0.0, 128
    %608 = vxpose.xlu0.b32.cont [7/16] 0.0, 128
    %609 = vxpose.xlu0.b32.cont [8/16] 0.0, 128
    %610 = vxpose.xlu0.b32.cont [9/16] 0.0, 128
    %611 = vxpose.xlu0.b32.cont [10/16] 0.0, 128
    %612 = vxpose.xlu0.b32.cont [11/16] 0.0, 128
    %613 = vxpose.xlu0.b32.cont [12/16] 0.0, 128
    %614 = vxpose.xlu0.b32.cont [13/16] 0.0, 128
    %615 = vxpose.xlu0.b32.cont [14/16] 0.0, 128
    %616 = vxpose.xlu0.b32.cont [15/16] 0.0, 128
    %617 = vxpose.xlu0.b32.end [16/16] 0.0, 128
    %v618 = vpop.trf.xlu0
    %v619 = vpop.trf.xlu0
    %v620 = vpop.trf.xlu0
    %v621 = vpop.trf.xlu0
    %v622 = vpop.trf.xlu0
    %v623 = vpop.trf.xlu0
    %v624 = vpop.trf.xlu0
    %v625 = vpop.trf.xlu0
    %v626 = vpop.trf.xlu0
    %v627 = vpop.trf.xlu0
    %v628 = vpop.trf.xlu0
    %v629 = vpop.trf.xlu0
    %v630 = vpop.trf.xlu0
    %v631 = vpop.trf.xlu0
    %v632 = vpop.trf.xlu0
    %v633 = vpop.trf.xlu0
    %634 = vxpose.xlu0.b32.start [1/16] %v601, 128
    %635 = vxpose.xlu0.b32.cont [2/16] 0.0, 128
    %636 = vxpose.xlu0.b32.cont [3/16] 0.0, 128
    %637 = vxpose.xlu0.b32.cont [4/16] 0.0, 128
    %638 = vxpose.xlu0.b32.cont [5/16] 0.0, 128
    %639 = vxpose.xlu0.b32.cont [6/16] 0.0, 128
    %640 = vxpose.xlu0.b32.cont [7/16] 0.0, 128
    %641 = vxpose.xlu0.b32.cont [8/16] 0.0, 128
    %642 = vxpose.xlu0.b32.cont [9/16] 0.0, 128
    %643 = vxpose.xlu0.b32.cont [10/16] 0.0, 128
    %644 = vxpose.xlu0.b32.cont [11/16] 0.0, 128
    %645 = vxpose.xlu0.b32.cont [12/16] 0.0, 128
    %646 = vxpose.xlu0.b32.cont [13/16] 0.0, 128
    %647 = vxpose.xlu0.b32.cont [14/16] 0.0, 128
    %648 = vxpose.xlu0.b32.cont [15/16] 0.0, 128
    %649 = vxpose.xlu0.b32.end [16/16] 0.0, 128
    %v650 = vpop.trf.xlu0
    %v651 = vpop.trf.xlu0
    %v652 = vpop.trf.xlu0
    %v653 = vpop.trf.xlu0
    %v654 = vpop.trf.xlu0
    %v655 = vpop.trf.xlu0
    %v656 = vpop.trf.xlu0
    %v657 = vpop.trf.xlu0
    %v658 = vpop.trf.xlu0
    %v659 = vpop.trf.xlu0
    %v660 = vpop.trf.xlu0
    %v661 = vpop.trf.xlu0
    %v662 = vpop.trf.xlu0
    %v663 = vpop.trf.xlu0
    %v664 = vpop.trf.xlu0
    %v665 = vpop.trf.xlu0
    %666 = vst.msk [vmem:[#allocation10] sm:$0xff] %vm361, %v618
    %667 = vst.msk [vmem:[#allocation10 + $0x8] sm:$0xff] %vm361, %v650
    // Predicated region
    $region34: #{tpu_custom_call.1} parent=1 // pred_check
      _
    $region35: #{tpu_custom_call.1} parent=1 // pred_check_branch
      %669 = sbr.rel (0) target = $region37
    $region36: #{tpu_custom_call.1} parent=1 // pred_region
      %s671 = ssub.s32 256, 256
      %672 = vsyncadd [#allocation6], %s671
      %s673 = sshll.u32 [#allocation10], 4
      %s674 = int_to_ptr.vmem [resolvable:$true] %s673
      %679 = dma.vmem_to_hbm [thread:$0]  %s674, 256, %s5, [#allocation6], 128, 128, 8
    $region37: #{tpu_custom_call.1} parent=1 // pred_fallthru
      _
    // Predicated region
    $region38: #{tpu_custom_call.1} parent=1 // pred_check
      _
    $region39: #{tpu_custom_call.1} parent=1 // pred_check_branch
      %681 = sbr.rel (0) target = $region41
    $region40: #{tpu_custom_call.1} parent=1 // pred_region
      %682 = dma.done [#allocation6], 256
    $region41: #{tpu_custom_call.1} parent=1 // pred_fallthru
      _
    %683 = vsyncpa [#allocation5], 1
    %684 = vsyncpa [#allocation8], 1
    %685 = vsyncpa [#allocation6], 1

</llo_original>
